<compile_context>
chip_gen: v7x
topology: tpu7x:2x2x1
jax: 0.10.0
libtpu: 0.0.40
codegen_flags: <defaults>
</compile_context>

<pallas_src>
import functools

import jax
import jax.numpy as jnp
from jax.experimental import pallas as pl
from jax.experimental.pallas import tpu as pltpu


def _mlp_res_kernel(x_ref, wcat_ref, b1_ref, bsc_ref, w2_ref, o_ref, *, ch, compute_dtype):
    # x_ref: (1, Cin, tn)  wcat_ref: (Ch+Cout, Cin)  b1_ref: (Ch, 1)
    # bsc_ref: (Cout, 1)   w2_ref: (Cout, Ch)        o_ref: (1, Cout, tn)
    x = x_ref[0].astype(compute_dtype)                                   # (Cin, tn)
    # Fused first stage: [W1; Ws] @ x -> (Ch+Cout, tn), f32 accumulation on the MXU.
    y = jnp.dot(wcat_ref[...], x, preferred_element_type=jnp.float32)
    # Bias + ReLU only on the hidden half (no full-width bias sweep over y).
    h = jnp.maximum(y[:ch] + b1_ref[...], 0.0).astype(compute_dtype)     # (Ch, tn)
    # Second stage + shortcut (b2 already folded into the shortcut bias).
    out = (jnp.dot(w2_ref[...], h, preferred_element_type=jnp.float32)
           + y[ch:] + bsc_ref[...])                                      # (Cout, tn)
    o_ref[0] = out.astype(o_ref.dtype)


def _pick_lane_tile(n, batch, tn_cap):
    """Largest multiple-of-128 lane tile that divides the 128-padded n, is <= tn_cap,
    and (when possible) leaves >= 2 total grid steps so v7x's two TensorCores both
    get work (the grid axes are marked "parallel")."""
    n128 = -(-n // 128) * 128
    n_blocks = n128 // 128
    cap_blocks = max(1, min(int(tn_cap) // 128, n_blocks))
    divisors = [d for d in range(1, cap_blocks + 1) if n_blocks % d == 0]
    split_ok = [d for d in divisors if batch * (n_blocks // d) >= 2]
    blocks = max(split_ok) if split_ok else max(divisors)
    return blocks * 128, n128


def mlp_res_forward(x, params, *, tn=2048, compute_dtype=jnp.bfloat16, out_dtype=None):
    """x: (B, in_dim, N) (NCW, same as PyTorch). Returns (B, out_dim, N)."""
    w1, b1, w2, b2, ws, bs = params
    B, Cin, N = x.shape
    Ch = w1.shape[0]
    Cout = w2.shape[0]
    out_dtype = x.dtype if out_dtype is None else out_dtype

    # Keep the [W1 ; Ws] concat boundary sublane-aligned: pad hidden channels to a
    # multiple of 8 with zero rows/cols (padded rows give relu(0 + 0) = 0 -> no effect).
    ch_pad = -(-Ch // 8) * 8
    if ch_pad != Ch:
        w1 = jnp.pad(w1, ((0, ch_pad - Ch), (0, 0)))
        b1 = jnp.pad(b1, (0, ch_pad - Ch))
        w2 = jnp.pad(w2, ((0, 0), (0, ch_pad - Ch)))

    # Trace-time weight prep: fuse the two x-consuming matmuls; fold b2 into the
    # shortcut bias (out = W2 @ relu(W1@x + b1) + Ws@x + (bs + b2)).
    wcat = jnp.concatenate([w1, ws], axis=0).astype(compute_dtype)   # (Ch+Cout, Cin)
    w2c = w2.astype(compute_dtype)                                   # (Cout, Ch)
    b1c = b1[:, None].astype(jnp.float32)                            # (Ch, 1)
    bsc = (bs + b2)[:, None].astype(jnp.float32)                     # (Cout, 1)

    # Lane tiling: tn divides the 128-padded N (no padded columns beyond alignment).
    tn, n_pad = _pick_lane_tile(N, B, tn)
    if n_pad != N:
        x = jnp.pad(x, ((0, 0), (0, 0), (0, n_pad - N)))
    grid = (B, n_pad // tn)

    in_isz = jnp.dtype(x.dtype).itemsize
    out_isz = jnp.dtype(out_dtype).itemsize
    w_isz = jnp.dtype(compute_dtype).itemsize
    flops = 2 * B * n_pad * (Cin * (ch_pad + Cout) + ch_pad * Cout)
    bytes_accessed = (B * Cin * n_pad * in_isz + B * Cout * n_pad * out_isz
                      + (wcat.size + w2c.size) * w_isz + (b1c.size + bsc.size) * 4)

    # VMEM budget from the actual part (v7x: 64 MiB/TC), with 2x headroom over the
    # double-buffered tiles + resident weights + in-kernel temporaries.
    try:
        vmem_cap = int(pltpu.get_tpu_info().vmem_capacity_bytes)
    except Exception:
        vmem_cap = 64 * 2**20  # conservative: v7x per-TC capacity
    tile_bytes = 2 * tn * (Cin * in_isz + Cout * out_isz)            # x/out, 2-deep
    w_bytes = 2 * ((wcat.size + w2c.size) * w_isz + (b1c.size + bsc.size) * 4)
    temp_bytes = tn * ((ch_pad + Cout) * 4 + ch_pad * w_isz + Cout * 4)
    vmem_limit = int(min(3 * vmem_cap // 4,
                         max(8 * 2**20, 2 * (tile_bytes + w_bytes + temp_bytes))))

    kernel = functools.partial(_mlp_res_kernel, ch=ch_pad, compute_dtype=compute_dtype)

    out = pl.pallas_call(
        kernel,
        out_shape=jax.ShapeDtypeStruct((B, Cout, n_pad), out_dtype),
        grid_spec=pltpu.PrefetchScalarGridSpec(
            num_scalar_prefetch=0,
            grid=grid,
            in_specs=[
                pl.BlockSpec((1, Cin, tn), lambda b, j: (b, 0, j)),       # x tile
                pl.BlockSpec((ch_pad + Cout, Cin), lambda b, j: (0, 0)),  # [W1; Ws]
                pl.BlockSpec((ch_pad, 1), lambda b, j: (0, 0)),           # b1
                pl.BlockSpec((Cout, 1), lambda b, j: (0, 0)),             # bs + b2
                pl.BlockSpec((Cout, ch_pad), lambda b, j: (0, 0)),        # W2
            ],
            out_specs=pl.BlockSpec((1, Cout, tn), lambda b, j: (b, 0, j)),
        ),
        compiler_params=pltpu.CompilerParams(
            dimension_semantics=("parallel", "parallel"),
            vmem_limit_bytes=vmem_limit,
        ),
        cost_estimate=pl.CostEstimate(
            flops=flops, transcendentals=0, bytes_accessed=bytes_accessed),
    )(x, wcat, b1c, bsc, w2c)

    if n_pad != N:
        out = out[:, :, :N]
    return out


def init_params(key, in_dim, hidden_dim, out_dim):
    """Deterministic synthetic weights with PyTorch nn.Conv1d(k=1) shapes.

    conv.weight (out, in, 1) -> stored as (out, in); conv.bias (out,).
    """
    k1, k2, k3, k4, k5, k6 = jax.random.split(key, 6)
    s1 = 1.0 / jnp.sqrt(in_dim)
    s2 = 1.0 / jnp.sqrt(hidden_dim)
    w1 = jax.random.uniform(k1, (hidden_dim, in_dim), jnp.float32, -s1, s1)
    b1 = jax.random.uniform(k2, (hidden_dim,), jnp.float32, -s1, s1)
    w2 = jax.random.uniform(k3, (out_dim, hidden_dim), jnp.float32, -s2, s2)
    b2 = jax.random.uniform(k4, (out_dim,), jnp.float32, -s2, s2)
    ws = jax.random.uniform(k5, (out_dim, in_dim), jnp.float32, -s1, s1)
    bs = jax.random.uniform(k6, (out_dim,), jnp.float32, -s1, s1)
    return w1, b1, w2, b2, ws, bs


def mlp_res_reference(x, params):
    """Pure-JAX reference with identical NCW semantics."""
    w1, b1, w2, b2, ws, bs = params
    h = jnp.maximum(jnp.einsum('oi,bin->bon', w1, x) + b1[None, :, None], 0.0)
    out = jnp.einsum('oi,bin->bon', w2, h) + b2[None, :, None]
    sc = jnp.einsum('oi,bin->bon', ws, x) + bs[None, :, None]
    return out + sc


if __name__ == "__main__":
    B, C, N = 2, 128, 16   # in_dim = hidden_dim = out_dim = 128 (module defaults)
    key = jax.random.PRNGKey(0)
    kx, kx2, kp = jax.random.split(key, 3)
    x = jax.random.normal(kx, (B, C, N), jnp.float32)
    params = init_params(kp, C, C, C)

    ref = mlp_res_reference(x, params)

    # f32-operand path (strict check vs. the XLA reference).
    out_f32 = jax.block_until_ready(
        mlp_res_forward(x, params, compute_dtype=jnp.float32))
    assert out_f32.shape == (B, C, N)
    assert jnp.allclose(out_f32, ref, atol=2e-3, rtol=2e-3)

    # Default bf16-operand path (f32 accumulation on the MXU).
    out_bf = jax.block_until_ready(mlp_res_forward(x, params))
    rel = jnp.max(jnp.abs(out_bf.astype(jnp.float32) - ref)) / (jnp.max(jnp.abs(ref)) + 1e-6)
    assert out_bf.shape == (B, C, N)
    assert rel < 8e-2

    # Non-multiple-of-128 N: exercises 128-padding + divisor-based tile selection.
    N2 = 200
    x2 = jax.random.normal(kx2, (B, C, N2), jnp.float32)
    ref2 = mlp_res_reference(x2, params)
    out2 = jax.block_until_ready(mlp_res_forward(x2, params))
    rel2 = jnp.max(jnp.abs(out2.astype(jnp.float32) - ref2)) / (jnp.max(jnp.abs(ref2)) + 1e-6)
    assert out2.shape == (B, C, N2)
    assert rel2 < 8e-2

    print("KERNEL_OK")
</pallas_src>

<mosaic_0001>
module attributes {stable_mosaic.version = 11 : i64} {
  func.func @_mlp_res_kernel(%arg0: i32, %arg1: i32, %arg2: memref<1x128x128xf32, #tpu.memory_space<vmem>>, %arg3: memref<256x128xf32, #tpu.memory_space<vmem>>, %arg4: memref<128x1xf32, #tpu.memory_space<vmem>>, %arg5: memref<128x1xf32, #tpu.memory_space<vmem>>, %arg6: memref<128x128xf32, #tpu.memory_space<vmem>>, %arg7: memref<1x128x128xf32, #tpu.memory_space<vmem>>) attributes {dimension_semantics = [#tpu.dimension_semantics<parallel>, #tpu.dimension_semantics<parallel>], iteration_bounds = array<i64: 2, 1>, scalar_prefetch = 0 : i64, scratch_operands = 0 : i64, tpu.core_type = #tpu.core_type<tc>, window_params = [{transform_indices = @transform_0, window_bounds = array<i64: 1, 128, 128>}, {pipeline_mode = #tpu.pipeline_mode<synchronous>, transform_indices = @transform_1, window_bounds = array<i64: 256, 128>}, {pipeline_mode = #tpu.pipeline_mode<synchronous>, transform_indices = @transform_2, window_bounds = array<i64: 128, 1>}, {pipeline_mode = #tpu.pipeline_mode<synchronous>, transform_indices = @transform_3, window_bounds = array<i64: 128, 1>}, {pipeline_mode = #tpu.pipeline_mode<synchronous>, transform_indices = @transform_4, window_bounds = array<i64: 128, 128>}, {transform_indices = @transform_5, window_bounds = array<i64: 1, 128, 128>}]} {
    %c0 = arith.constant 0 : index
    %c0_0 = arith.constant 0 : index
    %c0_1 = arith.constant 0 : index
    %0 = vector.load %arg2[%c0, %c0_0, %c0_1] : memref<1x128x128xf32, #tpu.memory_space<vmem>>, vector<1x128x128xf32>
    %1 = vector.shape_cast %0 : vector<1x128x128xf32> to vector<128x128xf32>
    %c0_2 = arith.constant 0 : index
    %c0_3 = arith.constant 0 : index
    %2 = vector.load %arg3[%c0_2, %c0_3] : memref<256x128xf32, #tpu.memory_space<vmem>>, vector<256x128xf32>
    %cst = arith.constant dense<0.000000e+00> : vector<256x128xf32>
    %3 = tpu.matmul %2, %1, %cst {dimension_numbers = #tpu.dot_dimension_numbers<[1], [0], [0], [1], [0, 0, 1, 1], [], []>} : vector<256x128xf32>, vector<128x128xf32>, vector<256x128xf32> -> vector<256x128xf32>
    %4 = vector.extract_strided_slice %3 {offsets = [0, 0], sizes = [128, 128], strides = [1, 1]} : vector<256x128xf32> to vector<128x128xf32>
    %c0_4 = arith.constant 0 : index
    %c0_5 = arith.constant 0 : index
    %5 = vector.load %arg4[%c0_4, %c0_5] : memref<128x1xf32, #tpu.memory_space<vmem>>, vector<128x1xf32>
    %6 = vector.broadcast %5 : vector<128x1xf32> to vector<128x128xf32>
    %7 = arith.addf %4, %6 : vector<128x128xf32>
    %cst_6 = arith.constant 0.000000e+00 : f32
    %8 = vector.broadcast %cst_6 : f32 to vector<128x128xf32>
    %9 = arith.maximumf %7, %8 : vector<128x128xf32>
    %c0_7 = arith.constant 0 : index
    %c0_8 = arith.constant 0 : index
    %10 = vector.load %arg6[%c0_7, %c0_8] : memref<128x128xf32, #tpu.memory_space<vmem>>, vector<128x128xf32>
    %cst_9 = arith.constant dense<0.000000e+00> : vector<128x128xf32>
    %11 = tpu.matmul %10, %9, %cst_9 {dimension_numbers = #tpu.dot_dimension_numbers<[1], [0], [0], [1], [0, 0, 1, 1], [], []>} : vector<128x128xf32>, vector<128x128xf32>, vector<128x128xf32> -> vector<128x128xf32>
    %12 = vector.extract_strided_slice %3 {offsets = [128, 0], sizes = [128, 128], strides = [1, 1]} : vector<256x128xf32> to vector<128x128xf32>
    %13 = arith.addf %11, %12 : vector<128x128xf32>
    %c0_10 = arith.constant 0 : index
    %c0_11 = arith.constant 0 : index
    %14 = vector.load %arg5[%c0_10, %c0_11] : memref<128x1xf32, #tpu.memory_space<vmem>>, vector<128x1xf32>
    %15 = vector.broadcast %14 : vector<128x1xf32> to vector<128x128xf32>
    %16 = arith.addf %13, %15 : vector<128x128xf32>
    %c0_12 = arith.constant 0 : index
    %c0_13 = arith.constant 0 : index
    %c0_14 = arith.constant 0 : index
    %17 = vector.load %arg7[%c0_12, %c0_13, %c0_14] : memref<1x128x128xf32, #tpu.memory_space<vmem>>, vector<1x128x128xf32>
    %18 = vector.shape_cast %17 : vector<1x128x128xf32> to vector<128x128xf32>
    %19 = vector.shape_cast %16 : vector<128x128xf32> to vector<1x128x128xf32>
    tpu.vector_store %arg7[%c0_12, %c0_13, %c0_14], %19 {strides = array<i32>} : memref<1x128x128xf32, #tpu.memory_space<vmem>>, vector<1x128x128xf32>,
    return
  }
  func.func @transform_0(%arg0: i32, %arg1: i32) -> (i32, i32, i32) {
    %c0_i32 = arith.constant 0 : i32
    %c0_i32_0 = arith.constant 0 : i32
    return %arg0, %c0_i32, %arg1 : i32, i32, i32
  }
  func.func @transform_1(%arg0: i32, %arg1: i32) -> (i32, i32) {
    %c0_i32 = arith.constant 0 : i32
    %c0_i32_0 = arith.constant 0 : i32
    %c0_i32_1 = arith.constant 0 : i32
    return %c0_i32, %c0_i32_0 : i32, i32
  }
  func.func @transform_2(%arg0: i32, %arg1: i32) -> (i32, i32) {
    %c0_i32 = arith.constant 0 : i32
    %c0_i32_0 = arith.constant 0 : i32
    %c0_i32_1 = arith.constant 0 : i32
    return %c0_i32, %c0_i32_0 : i32, i32
  }
  func.func @transform_3(%arg0: i32, %arg1: i32) -> (i32, i32) {
    %c0_i32 = arith.constant 0 : i32
    %c0_i32_0 = arith.constant 0 : i32
    %c0_i32_1 = arith.constant 0 : i32
    return %c0_i32, %c0_i32_0 : i32, i32
  }
  func.func @transform_4(%arg0: i32, %arg1: i32) -> (i32, i32) {
    %c0_i32 = arith.constant 0 : i32
    %c0_i32_0 = arith.constant 0 : i32
    %c0_i32_1 = arith.constant 0 : i32
    return %c0_i32, %c0_i32_0 : i32, i32
  }
  func.func @transform_5(%arg0: i32, %arg1: i32) -> (i32, i32, i32) {
    %c0_i32 = arith.constant 0 : i32
    %c0_i32_0 = arith.constant 0 : i32
    return %arg0, %c0_i32, %arg1 : i32, i32, i32
  }
}

</mosaic_0001>

<llo_original>
// kernel: tpu_custom_call.1
$region0: #{tpu_custom_call.1}
  #allocation0 [shape = 'u32[]', space=smem, size = 0x4, offset = 0x4, fixed_abs, tag = 'smem constant byte address 0x4 - core index']
  #allocation1 [shape = 'u32[144,128]{1,0:T(1,128)}', space=vmem, size = 0x12000, scoped, tag = 'internal scratch']
  %s0 = inlined_call_operand.vmem [shape: f32[2,128,128], index: 0, kind: input, shape index: {}]
  %s1 = inlined_call_operand.hbm [shape: f32[256,128], index: 1, kind: input, shape index: {}]
  %s2 = inlined_call_operand.vmem [shape: f32[128,1], index: 2, kind: input, shape index: {}]
  %s3 = inlined_call_operand.vmem [shape: f32[128,1], index: 3, kind: input, shape index: {}]
  %s4 = inlined_call_operand.hbm [shape: f32[128,128], index: 4, kind: input, shape index: {}]
  %s5 = inlined_call_operand.hbm [shape: f32[2,128,128], index: 5, kind: output, shape index: {}]
  %s6 = sld [smem:[#allocation0]]
  $region61: #{tpu_custom_call.1} parent=0
    _
  %s8 = ssub.s32 1, %s6
  %s9 = scalar_select 0, %s8, %s6
  $region1: #{tpu_custom_call.1} parent=0
    #allocation2 [shape = 'u8[131072]{0}', space=vmem, size = 0x20000, scoped, tag = 'input window, operand 1, single buffered']
    #allocation3 [shape = 's32[2]{0}', space=sflag, size = 0x8, scoped, tag = 'scoped memory for tpu_custom_call.1']
    #allocation4 [shape = 's32[2]{0}', space=sflag, size = 0x8, scoped, tag = 'scoped memory for tpu_custom_call.1']
    #allocation5 [shape = 'u8[65536]{0}', space=vmem, size = 0x10000, scoped, tag = 'input window, operand 4, single buffered']
    #allocation6 [shape = 's32[1]{0}', space=sflag, size = 0x4, scoped, tag = 'scoped memory for tpu_custom_call.1']
    #allocation7 [shape = 'u8[131072]{0}', space=vmem, size = 0x20000, scoped, tag = 'output window, operand 0']
    %10 = vsyncpa [#allocation3], 0
    %11 = vsyncpa [#allocation6], 0
    %12 = vsyncpa [#allocation4], 0
    %s13 = scalar_lea.sflag [#allocation4], 1
    %14 = vsyncpa %s13, 0
    loop: start=0, step=1, limit=4
    $region2: #{tpu_custom_call.1} parent=1 // loop_pre_header
      _
    $region3: #{tpu_custom_call.1} parent=1 // loop_header
      %s16 = sphi 0, %s20
      %p17 = scmp.ge.s32.totalorder %s16, 4
      %s23 = sphi 0, %s35
      %s24 = sphi 0, %s31
      %s25 = sphi 0, %s23
      %s26 = sphi 0, %s24
      %s27 = sphi 0, %s25
      %s28 = sphi 0, %s26
      %s40 = sphi 0, %s42
      %s43 = sphi 0, %s40
      %s44 = sphi 0, %s43
      %s60 = sphi 0, %s44
      %s64 = sphi 0, %s64
      %s66 = sphi 0, %s64
      %s67 = sphi 0, %s66
      %s81 = sphi 0, %s67
      %s85 = sphi 0, %s85
      %s87 = sphi 0, %s85
      %s88 = sphi 0, %s87
      %s102 = sphi 0, %s88
      %s106 = sphi 0, %s106
      %s108 = sphi 0, %s106
      %s109 = sphi 0, %s108
      %s123 = sphi 0, %s109
      %s127 = sphi 0, %s127
      %s129 = sphi 0, %s127
      %s130 = sphi 0, %s129
      %s144 = sphi 0, %s130
      %s152 = sphi 0, %s154
      %s155 = sphi 0, %s152
      %s156 = sphi 0, %s155
      %s172 = sphi 0, %s156
    $region4: #{tpu_custom_call.1} parent=1 // loop_header_branch
      %19 = sbr.rel (%p17) target = $region8
    $region5: #{tpu_custom_call.1} parent=1 // loop_body
      %s21 = ssub.s32 %s16, 1
      %s22 = ssub.s32 %s16, 2
      %s29 = sadd.s32 1, %s24
      %p30 = scmp.ge.s32.totalorder %s29, 1
      %s31 = scalar_select %p30, 0, %s29
      %s32 = sadd.s32 1, %s23
      %s33 = scalar_select %p30, %s32, %s23
      %p34 = scmp.ge.s32.totalorder %s33, 2
      %s35 = scalar_select %p34, 0, %s33
      %s36 = ssub.s32 %s23, %s35
      %s37 = ssub.s32 %s24, %s31
      %s38 = sor.u32 %s36, %s37
      %p39 = scmp.eq.s32.totalorder %s38, 0
      %s41 = sadd.s32 %s40, 1
      %s42 = scalar_select %p39, %s40, %s41
      %p45 = pneg %p39
      %p46 = scmp.eq.s32.totalorder %s16, 1
      %p47 = por %p45, %p46
      %p48 = scmp.ne.s32.totalorder %s40, %s43
      %p49 = scmp.eq.s32.totalorder %s16, 0
      %p50 = por %p48, %p49
      %p51 = scmp.ne.s32.totalorder %s40, %s43
      %p52 = scmp.eq.s32.totalorder %s21, 1
      %p53 = por %p51, %p52
      %p54 = scmp.ne.s32.totalorder %s43, %s44
      %p55 = scmp.eq.s32.totalorder %s21, 0
      %p56 = por %p54, %p55
      %p57 = scmp.ne.s32.totalorder %s43, %s44
      %p58 = scmp.eq.s32.totalorder %s22, 1
      %p59 = por %p57, %p58
      %p61 = scmp.ne.s32.totalorder %s44, %s60
      %p62 = scmp.eq.s32.totalorder %s22, 0
      %p63 = por %p61, %p62
      %s65 = sadd.s32 %s64, 1
      %p68 = scmp.eq.s32.totalorder %s16, 1
      %p69 = scmp.ne.s32.totalorder %s64, %s66
      %p70 = scmp.eq.s32.totalorder %s16, 0
      %p71 = por %p69, %p70
      %p72 = scmp.ne.s32.totalorder %s64, %s66
      %p73 = scmp.eq.s32.totalorder %s21, 1
      %p74 = por %p72, %p73
      %p75 = scmp.ne.s32.totalorder %s66, %s67
      %p76 = scmp.eq.s32.totalorder %s21, 0
      %p77 = por %p75, %p76
      %p78 = scmp.ne.s32.totalorder %s66, %s67
      %p79 = scmp.eq.s32.totalorder %s22, 1
      %p80 = por %p78, %p79
      %p82 = scmp.ne.s32.totalorder %s67, %s81
      %p83 = scmp.eq.s32.totalorder %s22, 0
      %p84 = por %p82, %p83
      %s86 = sadd.s32 %s85, 1
      %p89 = scmp.eq.s32.totalorder %s16, 1
      %p90 = scmp.ne.s32.totalorder %s85, %s87
      %p91 = scmp.eq.s32.totalorder %s16, 0
      %p92 = por %p90, %p91
      %p93 = scmp.ne.s32.totalorder %s85, %s87
      %p94 = scmp.eq.s32.totalorder %s21, 1
      %p95 = por %p93, %p94
      %p96 = scmp.ne.s32.totalorder %s87, %s88
      %p97 = scmp.eq.s32.totalorder %s21, 0
      %p98 = por %p96, %p97
      %p99 = scmp.ne.s32.totalorder %s87, %s88
      %p100 = scmp.eq.s32.totalorder %s22, 1
      %p101 = por %p99, %p100
      %p103 = scmp.ne.s32.totalorder %s88, %s102
      %p104 = scmp.eq.s32.totalorder %s22, 0
      %p105 = por %p103, %p104
      %s107 = sadd.s32 %s106, 1
      %p110 = scmp.eq.s32.totalorder %s16, 1
      %p111 = scmp.ne.s32.totalorder %s106, %s108
      %p112 = scmp.eq.s32.totalorder %s16, 0
      %p113 = por %p111, %p112
      %p114 = scmp.ne.s32.totalorder %s106, %s108
      %p115 = scmp.eq.s32.totalorder %s21, 1
      %p116 = por %p114, %p115
      %p117 = scmp.ne.s32.totalorder %s108, %s109
      %p118 = scmp.eq.s32.totalorder %s21, 0
      %p119 = por %p117, %p118
      %p120 = scmp.ne.s32.totalorder %s108, %s109
      %p121 = scmp.eq.s32.totalorder %s22, 1
      %p122 = por %p120, %p121
      %p124 = scmp.ne.s32.totalorder %s109, %s123
      %p125 = scmp.eq.s32.totalorder %s22, 0
      %p126 = por %p124, %p125
      %s128 = sadd.s32 %s127, 1
      %p131 = scmp.eq.s32.totalorder %s16, 1
      %p132 = scmp.ne.s32.totalorder %s127, %s129
      %p133 = scmp.eq.s32.totalorder %s16, 0
      %p134 = por %p132, %p133
      %p135 = scmp.ne.s32.totalorder %s127, %s129
      %p136 = scmp.eq.s32.totalorder %s21, 1
      %p137 = por %p135, %p136
      %p138 = scmp.ne.s32.totalorder %s129, %s130
      %p139 = scmp.eq.s32.totalorder %s21, 0
      %p140 = por %p138, %p139
      %p141 = scmp.ne.s32.totalorder %s129, %s130
      %p142 = scmp.eq.s32.totalorder %s22, 1
      %p143 = por %p141, %p142
      %p145 = scmp.ne.s32.totalorder %s130, %s144
      %p146 = scmp.eq.s32.totalorder %s22, 0
      %p147 = por %p145, %p146
      %s148 = ssub.s32 %s23, %s35
      %s149 = ssub.s32 %s24, %s31
      %s150 = sor.u32 %s148, %s149
      %p151 = scmp.eq.s32.totalorder %s150, 0
      %s153 = sadd.s32 %s152, 1
      %s154 = scalar_select %p151, %s152, %s153
      %p157 = pneg %p151
      %p158 = scmp.eq.s32.totalorder %s16, 1
      %p159 = por %p157, %p158
      %p160 = scmp.ne.s32.totalorder %s152, %s155
      %p161 = scmp.eq.s32.totalorder %s16, 0
      %p162 = por %p160, %p161
      %p163 = scmp.ne.s32.totalorder %s152, %s155
      %p164 = scmp.eq.s32.totalorder %s21, 1
      %p165 = por %p163, %p164
      %p166 = scmp.ne.s32.totalorder %s155, %s156
      %p167 = scmp.eq.s32.totalorder %s21, 0
      %p168 = por %p166, %p167
      %p169 = scmp.ne.s32.totalorder %s155, %s156
      %p170 = scmp.eq.s32.totalorder %s22, 1
      %p171 = por %p169, %p170
      %p173 = scmp.ne.s32.totalorder %s156, %s172
      %p174 = scmp.eq.s32.totalorder %s22, 0
      %p175 = por %p173, %p174
      %p176 = scmp.le.s32.totalorder 1, %s16
      %p177 = scmp.lt.s32.totalorder %s16, 3
      %p178 = pnand %p176, %p177
      %p179 = pneg %p178
      // Predicated region
      $region9: #{tpu_custom_call.1} parent=5 // pred_check
        _
      $region10: #{tpu_custom_call.1} parent=5 // pred_check_branch
        %181 = sbr.rel (%p178) target = $region12
      $region11: #{tpu_custom_call.1} parent=5 // pred_region
        %s182 = ssub.s32 %s16, 1
        // Predicated region
        $region13: #{tpu_custom_call.1} parent=11 // pred_check
          %p183 = pneg %p77
        $region14: #{tpu_custom_call.1} parent=11 // pred_check_branch
          %185 = sbr.rel (%p183) target = $region16
        $region15: #{tpu_custom_call.1} parent=11 // pred_region
          %s187 = ssub.s32 4096, 4096
          %188 = vsyncadd [#allocation3], %s187
          %s189 = sshll.u32 [#allocation2], 4
          %s190 = int_to_ptr.vmem [resolvable:$true] %s189
          %195 = dma.hbm_to_vmem [thread:$0]  %s1, 4096, %s190, [#allocation3], 128, 128, 8
        $region16: #{tpu_custom_call.1} parent=11 // pred_fallthru
          _
        // Predicated region
        $region17: #{tpu_custom_call.1} parent=11 // pred_check
          %p196 = pneg %p98
        $region18: #{tpu_custom_call.1} parent=11 // pred_check_branch
          %198 = sbr.rel (%p196) target = $region20
        $region19: #{tpu_custom_call.1} parent=11 // pred_region
          _
        $region20: #{tpu_custom_call.1} parent=11 // pred_fallthru
          _
        // Predicated region
        $region21: #{tpu_custom_call.1} parent=11 // pred_check
          %p199 = pneg %p119
        $region22: #{tpu_custom_call.1} parent=11 // pred_check_branch
          %201 = sbr.rel (%p199) target = $region24
        $region23: #{tpu_custom_call.1} parent=11 // pred_region
          _
        $region24: #{tpu_custom_call.1} parent=11 // pred_fallthru
          _
        // Predicated region
        $region25: #{tpu_custom_call.1} parent=11 // pred_check
          %p202 = pneg %p140
        $region26: #{tpu_custom_call.1} parent=11 // pred_check_branch
          %204 = sbr.rel (%p202) target = $region28
        $region27: #{tpu_custom_call.1} parent=11 // pred_region
          %s206 = ssub.s32 2048, 2048
          %207 = vsyncadd [#allocation6], %s206
          %s208 = sshll.u32 [#allocation5], 4
          %s209 = int_to_ptr.vmem [resolvable:$true] %s208
          %214 = dma.hbm_to_vmem [thread:$0]  %s4, 2048, %s209, [#allocation6], 128, 128, 8
        $region28: #{tpu_custom_call.1} parent=11 // pred_fallthru
          _
      $region12: #{tpu_custom_call.1} parent=5 // pred_fallthru
        _
      %p215 = scmp.lt.s32.totalorder %s16, 2
      // Predicated region
      $region29: #{tpu_custom_call.1} parent=5 // pred_check
        %p216 = pneg %p215
      $region30: #{tpu_custom_call.1} parent=5 // pred_check_branch
        %218 = sbr.rel (%p216) target = $region32
      $region31: #{tpu_custom_call.1} parent=5 // pred_region
        // Predicated region
        $region33: #{tpu_custom_call.1} parent=31 // pred_check
          %p219 = pneg %p50
        $region34: #{tpu_custom_call.1} parent=31 // pred_check_branch
          %221 = sbr.rel (%p219) target = $region36
        $region35: #{tpu_custom_call.1} parent=31 // pred_region
          %p222 = scmp.lt.s32.totalorder %s23, 1
          %s223 = scalar_select %p222, %s23, 1
          %p224 = scmp.lt.s32.totalorder %s24, 0
          %s225 = scalar_select %p224, %s24, 0
          %s226 = smul.addr %s223, 16
          %s227 = sadd.s32 %s225, %s226
          %s228 = smul.addr %s227, 8
          %s229 = scalar_lea.vmem %s0, %s228
        $region36: #{tpu_custom_call.1} parent=31 // pred_fallthru
          _
      $region32: #{tpu_custom_call.1} parent=5 // pred_fallthru
        _
      %p230 = scmp.le.s32.totalorder 1, %s16
      %p231 = scmp.lt.s32.totalorder %s16, 3
      %p232 = pnand %p230, %p231
      %p233 = pneg %p232
      // Predicated region
      $region37: #{tpu_custom_call.1} parent=5 // pred_check
        _
      $region38: #{tpu_custom_call.1} parent=5 // pred_check_branch
        %235 = sbr.rel (%p232) target = $region40
      $region39: #{tpu_custom_call.1} parent=5 // pred_region
        %s236 = ssub.s32 %s16, 1
        // Predicated region
        $region41: #{tpu_custom_call.1} parent=39 // pred_check
          %p237 = pneg %p77
        $region42: #{tpu_custom_call.1} parent=39 // pred_check_branch
          %239 = sbr.rel (%p237) target = $region44
        $region43: #{tpu_custom_call.1} parent=39 // pred_region
          %240 = dma.done [#allocation3], 4096
        $region44: #{tpu_custom_call.1} parent=39 // pred_fallthru
          _
        // Predicated region
        $region45: #{tpu_custom_call.1} parent=39 // pred_check
          %p241 = pneg %p140
        $region46: #{tpu_custom_call.1} parent=39 // pred_check_branch
          %243 = sbr.rel (%p241) target = $region48
        $region47: #{tpu_custom_call.1} parent=39 // pred_region
          %244 = dma.done [#allocation6], 2048
        $region48: #{tpu_custom_call.1} parent=39 // pred_fallthru
          _
        %p245 = scmp.lt.s32.totalorder %s25, 1
        %s246 = scalar_select %p245, %s25, 1
        %p247 = scmp.lt.s32.totalorder %s26, 0
        %s248 = scalar_select %p247, %s26, 0
        %s249 = smul.addr %s246, 16
        %s250 = sadd.s32 %s248, %s249
        %s251 = smul.addr %s250, 8
        %s252 = scalar_lea.vmem %s0, %s251
        %p253 = pneg %p56
        %p254 = pneg %p53
        %p255 = pneg %p77
        %p256 = pneg %p74
        %p257 = pneg %p98
        %p258 = pneg %p95
        %p259 = pneg %p119
        %p260 = pneg %p116
        %p261 = pneg %p140
        %p262 = pneg %p137
        %p263 = pneg %p168
        %p264 = pneg %p165
        %s265 = sand.u32 %s155, 1
        %s266 = scalar_lea.sflag [#allocation4], %s265
        %s267 = sand.u32 %s155, 1
        %s268 = smul.addr %s267, 128
        %s269 = scalar_lea.vmem [#allocation7], %s268
        %p270 = scmp.lt.s32.totalorder %s25, 1
        %s271 = scalar_select %p270, %s25, 1
        %p272 = scmp.lt.s32.totalorder %s26, 0
        %s273 = scalar_select %p272, %s26, 0
        %s274 = smul.addr %s271, 16
        %s275 = sadd.s32 %s273, %s274
        %s276 = smul.addr %s275, 8
        %s277 = scalar_lea.vmem %s0, %s276
        %v278 = vld [vmem:[%s277] sm:$0xff]
        %v279 = vld [vmem:[%s277 + $0x8] sm:$0xff]
        %v280 = vld [vmem:[%s277 + $0x10] sm:$0xff]
        %v281 = vld [vmem:[%s277 + $0x18] sm:$0xff]
        %v282 = vld [vmem:[%s277 + $0x20] sm:$0xff]
        %v283 = vld [vmem:[%s277 + $0x28] sm:$0xff]
        %v284 = vld [vmem:[%s277 + $0x30] sm:$0xff]
        %v285 = vld [vmem:[%s277 + $0x38] sm:$0xff]
        %v286 = vld [vmem:[%s277 + $0x40] sm:$0xff]
        %v287 = vld [vmem:[%s277 + $0x48] sm:$0xff]
        %v288 = vld [vmem:[%s277 + $0x50] sm:$0xff]
        %v289 = vld [vmem:[%s277 + $0x58] sm:$0xff]
        %v290 = vld [vmem:[%s277 + $0x60] sm:$0xff]
        %v291 = vld [vmem:[%s277 + $0x68] sm:$0xff]
        %v292 = vld [vmem:[%s277 + $0x70] sm:$0xff]
        %v293 = vld [vmem:[%s277 + $0x78] sm:$0xff]
        %v294 = vld [vmem:[#allocation2] sm:$0xff]
        %v295 = vld [vmem:[#allocation2 + $0x8] sm:$0xff]
        %v296 = vld [vmem:[#allocation2 + $0x10] sm:$0xff]
        %v297 = vld [vmem:[#allocation2 + $0x18] sm:$0xff]
        %v298 = vld [vmem:[#allocation2 + $0x20] sm:$0xff]
        %v299 = vld [vmem:[#allocation2 + $0x28] sm:$0xff]
        %v300 = vld [vmem:[#allocation2 + $0x30] sm:$0xff]
        %v301 = vld [vmem:[#allocation2 + $0x38] sm:$0xff]
        %v302 = vld [vmem:[#allocation2 + $0x40] sm:$0xff]
        %v303 = vld [vmem:[#allocation2 + $0x48] sm:$0xff]
        %v304 = vld [vmem:[#allocation2 + $0x50] sm:$0xff]
        %v305 = vld [vmem:[#allocation2 + $0x58] sm:$0xff]
        %v306 = vld [vmem:[#allocation2 + $0x60] sm:$0xff]
        %v307 = vld [vmem:[#allocation2 + $0x68] sm:$0xff]
        %v308 = vld [vmem:[#allocation2 + $0x70] sm:$0xff]
        %v309 = vld [vmem:[#allocation2 + $0x78] sm:$0xff]
        %v310 = vld [vmem:[#allocation2 + $0x80] sm:$0xff]
        %v311 = vld [vmem:[#allocation2 + $0x88] sm:$0xff]
        %v312 = vld [vmem:[#allocation2 + $0x90] sm:$0xff]
        %v313 = vld [vmem:[#allocation2 + $0x98] sm:$0xff]
        %v314 = vld [vmem:[#allocation2 + $0xa0] sm:$0xff]
        %v315 = vld [vmem:[#allocation2 + $0xa8] sm:$0xff]
        %v316 = vld [vmem:[#allocation2 + $0xb0] sm:$0xff]
        %v317 = vld [vmem:[#allocation2 + $0xb8] sm:$0xff]
        %v318 = vld [vmem:[#allocation2 + $0xc0] sm:$0xff]
        %v319 = vld [vmem:[#allocation2 + $0xc8] sm:$0xff]
        %v320 = vld [vmem:[#allocation2 + $0xd0] sm:$0xff]
        %v321 = vld [vmem:[#allocation2 + $0xd8] sm:$0xff]
        %v322 = vld [vmem:[#allocation2 + $0xe0] sm:$0xff]
        %v323 = vld [vmem:[#allocation2 + $0xe8] sm:$0xff]
        %v324 = vld [vmem:[#allocation2 + $0xf0] sm:$0xff]
        %v325 = vld [vmem:[#allocation2 + $0xf8] sm:$0xff]
        %326 = vmatprep.subr.mxu0 0.0
        %327 = vmatpush1.msra.mxu0 %v278
        %328 = vmatprep.subr.mxu0 0.0
        %329 = vmatpush1.msra.mxu0 %v279
        %330 = vmatprep.subr.mxu0 0.0
        %331 = vmatpush1.msra.mxu0 %v280
        %332 = vmatprep.subr.mxu0 0.0
        %333 = vmatpush1.msra.mxu0 %v281
        %334 = vmatprep.subr.mxu0 0.0
        %335 = vmatpush1.msra.mxu0 %v282
        %336 = vmatprep.subr.mxu0 0.0
        %337 = vmatpush1.msra.mxu0 %v283
        %338 = vmatprep.subr.mxu0 0.0
        %339 = vmatpush1.msra.mxu0 %v284
        %340 = vmatprep.subr.mxu0 0.0
        %341 = vmatpush1.msra.mxu0 %v285
        %342 = vmatprep.subr.mxu0 0.0
        %343 = vmatpush1.msra.mxu0 %v286
        %344 = vmatprep.subr.mxu0 0.0
        %345 = vmatpush1.msra.mxu0 %v287
        %346 = vmatprep.subr.mxu0 0.0
        %347 = vmatpush1.msra.mxu0 %v288
        %348 = vmatprep.subr.mxu0 0.0
        %349 = vmatpush1.msra.mxu0 %v289
        %350 = vmatprep.subr.mxu0 0.0
        %351 = vmatpush1.msra.mxu0 %v290
        %352 = vmatprep.subr.mxu0 0.0
        %353 = vmatpush1.msra.mxu0 %v291
        %354 = vmatprep.subr.mxu0 0.0
        %355 = vmatpush1.msra.mxu0 %v292
        %356 = vmatprep.subr.mxu0 0.0
        %357 = vmatpush1.msra.mxu0 %v293
        %358 = vmatprep.subr.mxu0 0.0
        %359 = vmatpush1.msra.mxu0 0.0
        %360 = vmatprep.subr.mxu0 0.0
        %361 = vmatpush1.msra.mxu0 0.0
        %362 = vmatprep.subr.mxu0 0.0
        %363 = vmatpush1.msra.mxu0 0.0
        %364 = vmatprep.subr.mxu0 0.0
        %365 = vmatpush1.msra.mxu0 0.0
        %366 = vmatprep.subr.mxu0 0.0
        %367 = vmatpush1.msra.mxu0 0.0
        %368 = vmatprep.subr.mxu0 0.0
        %369 = vmatpush1.msra.mxu0 0.0
        %370 = vmatprep.subr.mxu0 0.0
        %371 = vmatpush1.msra.mxu0 0.0
        %372 = vmatprep.subr.mxu0 0.0
        %373 = vmatpush1.msra.mxu0 0.0
        %374 = vmatprep.subr.mxu0 0.0
        %375 = vmatpush1.msra.mxu0 0.0
        %376 = vmatprep.subr.mxu0 0.0
        %377 = vmatpush1.msra.mxu0 0.0
        %378 = vmatprep.subr.mxu0 0.0
        %379 = vmatpush1.msra.mxu0 0.0
        %380 = vmatprep.subr.mxu0 0.0
        %381 = vmatpush1.msra.mxu0 0.0
        %382 = vmatprep.subr.mxu0 0.0
        %383 = vmatpush1.msra.mxu0 0.0
        %384 = vmatprep.subr.mxu0 0.0
        %385 = vmatpush1.msra.mxu0 0.0
        %386 = vmatprep.subr.mxu0 0.0
        %387 = vmatpush1.msra.mxu0 0.0
        %388 = vmatprep.subr.mxu0 0.0
        %389 = vmatpush1.msra.mxu0 0.0
        %390 = vmatprep.mubr.f32.mxu0 0.0
        %391 = vmatmul.mubr.f32.gmra.mrb[0].mxu0 %v294
        %v392 = vpop.f32.mrb[0].mxu0
        %v393 = vadd.f32 0.0, %v392
        %v394 = vpop.f32.mrb[0].mxu0
        %395 = vmatprep.mubr.f32.mxu0 0.0
        %396 = vmatmul.mubr.f32.gmra.mrb[0].mxu0 %v295
        %v397 = vpop.f32.mrb[0].mxu0
        %v398 = vadd.f32 0.0, %v397
        %v399 = vpop.f32.mrb[0].mxu0
        %400 = vmatprep.mubr.f32.mxu0 0.0
        %401 = vmatmul.mubr.f32.gmra.mrb[0].mxu0 %v296
        %v402 = vpop.f32.mrb[0].mxu0
        %v403 = vadd.f32 0.0, %v402
        %v404 = vpop.f32.mrb[0].mxu0
        %405 = vmatprep.mubr.f32.mxu0 0.0
        %406 = vmatmul.mubr.f32.gmra.mrb[0].mxu0 %v297
        %v407 = vpop.f32.mrb[0].mxu0
        %v408 = vadd.f32 0.0, %v407
        %v409 = vpop.f32.mrb[0].mxu0
        %410 = vmatprep.mubr.f32.mxu0 0.0
        %411 = vmatmul.mubr.f32.gmra.mrb[0].mxu0 %v298
        %v412 = vpop.f32.mrb[0].mxu0
        %v413 = vadd.f32 0.0, %v412
        %v414 = vpop.f32.mrb[0].mxu0
        %415 = vmatprep.mubr.f32.mxu0 0.0
        %416 = vmatmul.mubr.f32.gmra.mrb[0].mxu0 %v299
        %v417 = vpop.f32.mrb[0].mxu0
        %v418 = vadd.f32 0.0, %v417
        %v419 = vpop.f32.mrb[0].mxu0
        %420 = vmatprep.mubr.f32.mxu0 0.0
        %421 = vmatmul.mubr.f32.gmra.mrb[0].mxu0 %v300
        %v422 = vpop.f32.mrb[0].mxu0
        %v423 = vadd.f32 0.0, %v422
        %v424 = vpop.f32.mrb[0].mxu0
        %425 = vmatprep.mubr.f32.mxu0 0.0
        %426 = vmatmul.mubr.f32.gmra.mrb[0].mxu0 %v301
        %v427 = vpop.f32.mrb[0].mxu0
        %v428 = vadd.f32 0.0, %v427
        %v429 = vpop.f32.mrb[0].mxu0
        %430 = vmatprep.mubr.f32.mxu0 0.0
        %431 = vmatmul.mubr.f32.gmra.mrb[0].mxu0 %v302
        %v432 = vpop.f32.mrb[0].mxu0
        %v433 = vadd.f32 0.0, %v432
        %v434 = vpop.f32.mrb[0].mxu0
        %435 = vmatprep.mubr.f32.mxu0 0.0
        %436 = vmatmul.mubr.f32.gmra.mrb[0].mxu0 %v303
        %v437 = vpop.f32.mrb[0].mxu0
        %v438 = vadd.f32 0.0, %v437
        %v439 = vpop.f32.mrb[0].mxu0
        %440 = vmatprep.mubr.f32.mxu0 0.0
        %441 = vmatmul.mubr.f32.gmra.mrb[0].mxu0 %v304
        %v442 = vpop.f32.mrb[0].mxu0
        %v443 = vadd.f32 0.0, %v442
        %v444 = vpop.f32.mrb[0].mxu0
        %445 = vmatprep.mubr.f32.mxu0 0.0
        %446 = vmatmul.mubr.f32.gmra.mrb[0].mxu0 %v305
        %v447 = vpop.f32.mrb[0].mxu0
        %v448 = vadd.f32 0.0, %v447
        %v449 = vpop.f32.mrb[0].mxu0
        %450 = vmatprep.mubr.f32.mxu0 0.0
        %451 = vmatmul.mubr.f32.gmra.mrb[0].mxu0 %v306
        %v452 = vpop.f32.mrb[0].mxu0
        %v453 = vadd.f32 0.0, %v452
        %v454 = vpop.f32.mrb[0].mxu0
        %455 = vmatprep.mubr.f32.mxu0 0.0
        %456 = vmatmul.mubr.f32.gmra.mrb[0].mxu0 %v307
        %v457 = vpop.f32.mrb[0].mxu0
        %v458 = vadd.f32 0.0, %v457
        %v459 = vpop.f32.mrb[0].mxu0
        %460 = vmatprep.mubr.f32.mxu0 0.0
        %461 = vmatmul.mubr.f32.gmra.mrb[0].mxu0 %v308
        %v462 = vpop.f32.mrb[0].mxu0
        %v463 = vadd.f32 0.0, %v462
        %v464 = vpop.f32.mrb[0].mxu0
        %465 = vmatprep.mubr.f32.mxu0 0.0
        %466 = vmatmul.mubr.f32.gmra.mrb[0].mxu0 %v309
        %v467 = vpop.f32.mrb[0].mxu0
        %v468 = vadd.f32 0.0, %v467
        %v469 = vpop.f32.mrb[0].mxu0
        %470 = vmatprep.mubr.f32.mxu0 0.0
        %471 = vmatmul.mubr.f32.gmra.mrb[0].mxu0 %v310
        %v472 = vpop.f32.mrb[0].mxu0
        %v473 = vadd.f32 0.0, %v472
        %v474 = vpop.f32.mrb[0].mxu0
        %475 = vmatprep.mubr.f32.mxu0 0.0
        %476 = vmatmul.mubr.f32.gmra.mrb[0].mxu0 %v311
        %v477 = vpop.f32.mrb[0].mxu0
        %v478 = vadd.f32 0.0, %v477
        %v479 = vpop.f32.mrb[0].mxu0
        %480 = vmatprep.mubr.f32.mxu0 0.0
        %481 = vmatmul.mubr.f32.gmra.mrb[0].mxu0 %v312
        %v482 = vpop.f32.mrb[0].mxu0
        %v483 = vadd.f32 0.0, %v482
        %v484 = vpop.f32.mrb[0].mxu0
        %485 = vmatprep.mubr.f32.mxu0 0.0
        %486 = vmatmul.mubr.f32.gmra.mrb[0].mxu0 %v313
        %v487 = vpop.f32.mrb[0].mxu0
        %v488 = vadd.f32 0.0, %v487
        %v489 = vpop.f32.mrb[0].mxu0
        %490 = vmatprep.mubr.f32.mxu0 0.0
        %491 = vmatmul.mubr.f32.gmra.mrb[0].mxu0 %v314
        %v492 = vpop.f32.mrb[0].mxu0
        %v493 = vadd.f32 0.0, %v492
        %v494 = vpop.f32.mrb[0].mxu0
        %495 = vmatprep.mubr.f32.mxu0 0.0
        %496 = vmatmul.mubr.f32.gmra.mrb[0].mxu0 %v315
        %v497 = vpop.f32.mrb[0].mxu0
        %v498 = vadd.f32 0.0, %v497
        %v499 = vpop.f32.mrb[0].mxu0
        %500 = vmatprep.mubr.f32.mxu0 0.0
        %501 = vmatmul.mubr.f32.gmra.mrb[0].mxu0 %v316
        %v502 = vpop.f32.mrb[0].mxu0
        %v503 = vadd.f32 0.0, %v502
        %v504 = vpop.f32.mrb[0].mxu0
        %505 = vmatprep.mubr.f32.mxu0 0.0
        %506 = vmatmul.mubr.f32.gmra.mrb[0].mxu0 %v317
        %v507 = vpop.f32.mrb[0].mxu0
        %v508 = vadd.f32 0.0, %v507
        %v509 = vpop.f32.mrb[0].mxu0
        %510 = vmatprep.mubr.f32.mxu0 0.0
        %511 = vmatmul.mubr.f32.gmra.mrb[0].mxu0 %v318
        %v512 = vpop.f32.mrb[0].mxu0
        %v513 = vadd.f32 0.0, %v512
        %v514 = vpop.f32.mrb[0].mxu0
        %515 = vmatprep.mubr.f32.mxu0 0.0
        %516 = vmatmul.mubr.f32.gmra.mrb[0].mxu0 %v319
        %v517 = vpop.f32.mrb[0].mxu0
        %v518 = vadd.f32 0.0, %v517
        %v519 = vpop.f32.mrb[0].mxu0
        %520 = vmatprep.mubr.f32.mxu0 0.0
        %521 = vmatmul.mubr.f32.gmra.mrb[0].mxu0 %v320
        %v522 = vpop.f32.mrb[0].mxu0
        %v523 = vadd.f32 0.0, %v522
        %v524 = vpop.f32.mrb[0].mxu0
        %525 = vmatprep.mubr.f32.mxu0 0.0
        %526 = vmatmul.mubr.f32.gmra.mrb[0].mxu0 %v321
        %v527 = vpop.f32.mrb[0].mxu0
        %v528 = vadd.f32 0.0, %v527
        %v529 = vpop.f32.mrb[0].mxu0
        %530 = vmatprep.mubr.f32.mxu0 0.0
        %531 = vmatmul.mubr.f32.gmra.mrb[0].mxu0 %v322
        %v532 = vpop.f32.mrb[0].mxu0
        %v533 = vadd.f32 0.0, %v532
        %v534 = vpop.f32.mrb[0].mxu0
        %535 = vmatprep.mubr.f32.mxu0 0.0
        %536 = vmatmul.mubr.f32.gmra.mrb[0].mxu0 %v323
        %v537 = vpop.f32.mrb[0].mxu0
        %v538 = vadd.f32 0.0, %v537
        %v539 = vpop.f32.mrb[0].mxu0
        %540 = vmatprep.mubr.f32.mxu0 0.0
        %541 = vmatmul.mubr.f32.gmra.mrb[0].mxu0 %v324
        %v542 = vpop.f32.mrb[0].mxu0
        %v543 = vadd.f32 0.0, %v542
        %v544 = vpop.f32.mrb[0].mxu0
        %545 = vmatprep.mubr.f32.mxu0 0.0
        %546 = vmatmul.mubr.f32.gmra.mrb[0].mxu0 %v325
        %v547 = vpop.f32.mrb[0].mxu0
        %v548 = vadd.f32 0.0, %v547
        %v549 = vpop.f32.mrb[0].mxu0
        %550 = vdwg.mxu0
        %v551 = vld [vmem:[%s2] sm:$0xff]
        %v552 = vld [vmem:[%s2 + $0x8] sm:$0xff]
        %v553 = vld [vmem:[%s2 + $0x10] sm:$0xff]
        %v554 = vld [vmem:[%s2 + $0x18] sm:$0xff]
        %v555 = vld [vmem:[%s2 + $0x20] sm:$0xff]
        %v556 = vld [vmem:[%s2 + $0x28] sm:$0xff]
        %v557 = vld [vmem:[%s2 + $0x30] sm:$0xff]
        %v558 = vld [vmem:[%s2 + $0x38] sm:$0xff]
        %v559 = vld [vmem:[%s2 + $0x40] sm:$0xff]
        %v560 = vld [vmem:[%s2 + $0x48] sm:$0xff]
        %v561 = vld [vmem:[%s2 + $0x50] sm:$0xff]
        %v562 = vld [vmem:[%s2 + $0x58] sm:$0xff]
        %v563 = vld [vmem:[%s2 + $0x60] sm:$0xff]
        %v564 = vld [vmem:[%s2 + $0x68] sm:$0xff]
        %v565 = vld [vmem:[%s2 + $0x70] sm:$0xff]
        %v566 = vld [vmem:[%s2 + $0x78] sm:$0xff]
        %568 = vset.pattern.permute.xlu0 0
        %569 = vperm.xlu0 %568, %v551
        %v570 = vpop.permute.xlu0 %569
        %573 = vset.pattern.permute.xlu0 0
        %574 = vperm.xlu0 %573, %v552
        %v575 = vpop.permute.xlu0 %574
        %578 = vset.pattern.permute.xlu0 0
        %579 = vperm.xlu0 %578, %v553
        %v580 = vpop.permute.xlu0 %579
        %583 = vset.pattern.permute.xlu0 0
        %584 = vperm.xlu0 %583, %v554
        %v585 = vpop.permute.xlu0 %584
        %588 = vset.pattern.permute.xlu0 0
        %589 = vperm.xlu0 %588, %v555
        %v590 = vpop.permute.xlu0 %589
        %593 = vset.pattern.permute.xlu0 0
        %594 = vperm.xlu0 %593, %v556
        %v595 = vpop.permute.xlu0 %594
        %598 = vset.pattern.permute.xlu0 0
        %599 = vperm.xlu0 %598, %v557
        %v600 = vpop.permute.xlu0 %599
        %603 = vset.pattern.permute.xlu0 0
        %604 = vperm.xlu0 %603, %v558
        %v605 = vpop.permute.xlu0 %604
        %608 = vset.pattern.permute.xlu0 0
        %609 = vperm.xlu0 %608, %v559
        %v610 = vpop.permute.xlu0 %609
        %613 = vset.pattern.permute.xlu0 0
        %614 = vperm.xlu0 %613, %v560
        %v615 = vpop.permute.xlu0 %614
        %618 = vset.pattern.permute.xlu0 0
        %619 = vperm.xlu0 %618, %v561
        %v620 = vpop.permute.xlu0 %619
        %623 = vset.pattern.permute.xlu0 0
        %624 = vperm.xlu0 %623, %v562
        %v625 = vpop.permute.xlu0 %624
        %628 = vset.pattern.permute.xlu0 0
        %629 = vperm.xlu0 %628, %v563
        %v630 = vpop.permute.xlu0 %629
        %633 = vset.pattern.permute.xlu0 0
        %634 = vperm.xlu0 %633, %v564
        %v635 = vpop.permute.xlu0 %634
        %638 = vset.pattern.permute.xlu0 0
        %639 = vperm.xlu0 %638, %v565
        %v640 = vpop.permute.xlu0 %639
        %643 = vset.pattern.permute.xlu0 0
        %644 = vperm.xlu0 %643, %v566
        %v645 = vpop.permute.xlu0 %644
        %v647 = vadd.f32 %v393, %v570
        %v648 = vadd.f32 %v398, %v575
        %v649 = vadd.f32 %v403, %v580
        %v650 = vadd.f32 %v408, %v585
        %v651 = vadd.f32 %v413, %v590
        %v652 = vadd.f32 %v418, %v595
        %v653 = vadd.f32 %v423, %v600
        %v654 = vadd.f32 %v428, %v605
        %v655 = vadd.f32 %v433, %v610
        %v656 = vadd.f32 %v438, %v615
        %v657 = vadd.f32 %v443, %v620
        %v658 = vadd.f32 %v448, %v625
        %v659 = vadd.f32 %v453, %v630
        %v660 = vadd.f32 %v458, %v635
        %v661 = vadd.f32 %v463, %v640
        %v662 = vadd.f32 %v468, %v645
        %v663 = vmax.f32 %v647, 0.0
        %v664 = vmax.f32 %v648, 0.0
        %v665 = vmax.f32 %v649, 0.0
        %v666 = vmax.f32 %v650, 0.0
        %v667 = vmax.f32 %v651, 0.0
        %v668 = vmax.f32 %v652, 0.0
        %v669 = vmax.f32 %v653, 0.0
        %v670 = vmax.f32 %v654, 0.0
        %v671 = vmax.f32 %v655, 0.0
        %v672 = vmax.f32 %v656, 0.0
        %v673 = vmax.f32 %v657, 0.0
        %v674 = vmax.f32 %v658, 0.0
        %v675 = vmax.f32 %v659, 0.0
        %v676 = vmax.f32 %v660, 0.0
        %v677 = vmax.f32 %v661, 0.0
        %v678 = vmax.f32 %v662, 0.0
        %v679 = vld [vmem:[#allocation5] sm:$0xff]
        %v680 = vld [vmem:[#allocation5 + $0x8] sm:$0xff]
        %v681 = vld [vmem:[#allocation5 + $0x10] sm:$0xff]
        %v682 = vld [vmem:[#allocation5 + $0x18] sm:$0xff]
        %v683 = vld [vmem:[#allocation5 + $0x20] sm:$0xff]
        %v684 = vld [vmem:[#allocation5 + $0x28] sm:$0xff]
        %v685 = vld [vmem:[#allocation5 + $0x30] sm:$0xff]
        %v686 = vld [vmem:[#allocation5 + $0x38] sm:$0xff]
        %v687 = vld [vmem:[#allocation5 + $0x40] sm:$0xff]
        %v688 = vld [vmem:[#allocation5 + $0x48] sm:$0xff]
        %v689 = vld [vmem:[#allocation5 + $0x50] sm:$0xff]
        %v690 = vld [vmem:[#allocation5 + $0x58] sm:$0xff]
        %v691 = vld [vmem:[#allocation5 + $0x60] sm:$0xff]
        %v692 = vld [vmem:[#allocation5 + $0x68] sm:$0xff]
        %v693 = vld [vmem:[#allocation5 + $0x70] sm:$0xff]
        %v694 = vld [vmem:[#allocation5 + $0x78] sm:$0xff]
        %695 = vmatprep.subr.mxu0 0.0
        %696 = vmatpush1.msra.mxu0 %v663
        %697 = vmatprep.subr.mxu0 0.0
        %698 = vmatpush1.msra.mxu0 %v664
        %699 = vmatprep.subr.mxu0 0.0
        %700 = vmatpush1.msra.mxu0 %v665
        %701 = vmatprep.subr.mxu0 0.0
        %702 = vmatpush1.msra.mxu0 %v666
        %703 = vmatprep.subr.mxu0 0.0
        %704 = vmatpush1.msra.mxu0 %v667
        %705 = vmatprep.subr.mxu0 0.0
        %706 = vmatpush1.msra.mxu0 %v668
        %707 = vmatprep.subr.mxu0 0.0
        %708 = vmatpush1.msra.mxu0 %v669
        %709 = vmatprep.subr.mxu0 0.0
        %710 = vmatpush1.msra.mxu0 %v670
        %711 = vmatprep.subr.mxu0 0.0
        %712 = vmatpush1.msra.mxu0 %v671
        %713 = vmatprep.subr.mxu0 0.0
        %714 = vmatpush1.msra.mxu0 %v672
        %715 = vmatprep.subr.mxu0 0.0
        %716 = vmatpush1.msra.mxu0 %v673
        %717 = vmatprep.subr.mxu0 0.0
        %718 = vmatpush1.msra.mxu0 %v674
        %719 = vmatprep.subr.mxu0 0.0
        %720 = vmatpush1.msra.mxu0 %v675
        %721 = vmatprep.subr.mxu0 0.0
        %722 = vmatpush1.msra.mxu0 %v676
        %723 = vmatprep.subr.mxu0 0.0
        %724 = vmatpush1.msra.mxu0 %v677
        %725 = vmatprep.subr.mxu0 0.0
        %726 = vmatpush1.msra.mxu0 %v678
        %727 = vmatprep.subr.mxu0 0.0
        %728 = vmatpush1.msra.mxu0 0.0
        %729 = vmatprep.subr.mxu0 0.0
        %730 = vmatpush1.msra.mxu0 0.0
        %731 = vmatprep.subr.mxu0 0.0
        %732 = vmatpush1.msra.mxu0 0.0
        %733 = vmatprep.subr.mxu0 0.0
        %734 = vmatpush1.msra.mxu0 0.0
        %735 = vmatprep.subr.mxu0 0.0
        %736 = vmatpush1.msra.mxu0 0.0
        %737 = vmatprep.subr.mxu0 0.0
        %738 = vmatpush1.msra.mxu0 0.0
        %739 = vmatprep.subr.mxu0 0.0
        %740 = vmatpush1.msra.mxu0 0.0
        %741 = vmatprep.subr.mxu0 0.0
        %742 = vmatpush1.msra.mxu0 0.0
        %743 = vmatprep.subr.mxu0 0.0
        %744 = vmatpush1.msra.mxu0 0.0
        %745 = vmatprep.subr.mxu0 0.0
        %746 = vmatpush1.msra.mxu0 0.0
        %747 = vmatprep.subr.mxu0 0.0
        %748 = vmatpush1.msra.mxu0 0.0
        %749 = vmatprep.subr.mxu0 0.0
        %750 = vmatpush1.msra.mxu0 0.0
        %751 = vmatprep.subr.mxu0 0.0
        %752 = vmatpush1.msra.mxu0 0.0
        %753 = vmatprep.subr.mxu0 0.0
        %754 = vmatpush1.msra.mxu0 0.0
        %755 = vmatprep.subr.mxu0 0.0
        %756 = vmatpush1.msra.mxu0 0.0
        %757 = vmatprep.subr.mxu0 0.0
        %758 = vmatpush1.msra.mxu0 0.0
        %759 = vmatprep.mubr.f32.mxu0 0.0
        %760 = vmatmul.mubr.f32.gmra.mrb[0].mxu0 %v679
        %v761 = vpop.f32.mrb[0].mxu0
        %v762 = vadd.f32 %v473, %v761
        %v763 = vpop.f32.mrb[0].mxu0
        %764 = vmatprep.mubr.f32.mxu0 0.0
        %765 = vmatmul.mubr.f32.gmra.mrb[0].mxu0 %v680
        %v766 = vpop.f32.mrb[0].mxu0
        %v767 = vadd.f32 %v478, %v766
        %v768 = vpop.f32.mrb[0].mxu0
        %769 = vmatprep.mubr.f32.mxu0 0.0
        %770 = vmatmul.mubr.f32.gmra.mrb[0].mxu0 %v681
        %v771 = vpop.f32.mrb[0].mxu0
        %v772 = vadd.f32 %v483, %v771
        %v773 = vpop.f32.mrb[0].mxu0
        %774 = vmatprep.mubr.f32.mxu0 0.0
        %775 = vmatmul.mubr.f32.gmra.mrb[0].mxu0 %v682
        %v776 = vpop.f32.mrb[0].mxu0
        %v777 = vadd.f32 %v488, %v776
        %v778 = vpop.f32.mrb[0].mxu0
        %779 = vmatprep.mubr.f32.mxu0 0.0
        %780 = vmatmul.mubr.f32.gmra.mrb[0].mxu0 %v683
        %v781 = vpop.f32.mrb[0].mxu0
        %v782 = vadd.f32 %v493, %v781
        %v783 = vpop.f32.mrb[0].mxu0
        %784 = vmatprep.mubr.f32.mxu0 0.0
        %785 = vmatmul.mubr.f32.gmra.mrb[0].mxu0 %v684
        %v786 = vpop.f32.mrb[0].mxu0
        %v787 = vadd.f32 %v498, %v786
        %v788 = vpop.f32.mrb[0].mxu0
        %789 = vmatprep.mubr.f32.mxu0 0.0
        %790 = vmatmul.mubr.f32.gmra.mrb[0].mxu0 %v685
        %v791 = vpop.f32.mrb[0].mxu0
        %v792 = vadd.f32 %v503, %v791
        %v793 = vpop.f32.mrb[0].mxu0
        %794 = vmatprep.mubr.f32.mxu0 0.0
        %795 = vmatmul.mubr.f32.gmra.mrb[0].mxu0 %v686
        %v796 = vpop.f32.mrb[0].mxu0
        %v797 = vadd.f32 %v508, %v796
        %v798 = vpop.f32.mrb[0].mxu0
        %799 = vmatprep.mubr.f32.mxu0 0.0
        %800 = vmatmul.mubr.f32.gmra.mrb[0].mxu0 %v687
        %v801 = vpop.f32.mrb[0].mxu0
        %v802 = vadd.f32 %v513, %v801
        %v803 = vpop.f32.mrb[0].mxu0
        %804 = vmatprep.mubr.f32.mxu0 0.0
        %805 = vmatmul.mubr.f32.gmra.mrb[0].mxu0 %v688
        %v806 = vpop.f32.mrb[0].mxu0
        %v807 = vadd.f32 %v518, %v806
        %v808 = vpop.f32.mrb[0].mxu0
        %809 = vmatprep.mubr.f32.mxu0 0.0
        %810 = vmatmul.mubr.f32.gmra.mrb[0].mxu0 %v689
        %v811 = vpop.f32.mrb[0].mxu0
        %v812 = vadd.f32 %v523, %v811
        %v813 = vpop.f32.mrb[0].mxu0
        %814 = vmatprep.mubr.f32.mxu0 0.0
        %815 = vmatmul.mubr.f32.gmra.mrb[0].mxu0 %v690
        %v816 = vpop.f32.mrb[0].mxu0
        %v817 = vadd.f32 %v528, %v816
        %v818 = vpop.f32.mrb[0].mxu0
        %819 = vmatprep.mubr.f32.mxu0 0.0
        %820 = vmatmul.mubr.f32.gmra.mrb[0].mxu0 %v691
        %v821 = vpop.f32.mrb[0].mxu0
        %v822 = vadd.f32 %v533, %v821
        %v823 = vpop.f32.mrb[0].mxu0
        %824 = vmatprep.mubr.f32.mxu0 0.0
        %825 = vmatmul.mubr.f32.gmra.mrb[0].mxu0 %v692
        %v826 = vpop.f32.mrb[0].mxu0
        %v827 = vadd.f32 %v538, %v826
        %v828 = vpop.f32.mrb[0].mxu0
        %829 = vmatprep.mubr.f32.mxu0 0.0
        %830 = vmatmul.mubr.f32.gmra.mrb[0].mxu0 %v693
        %v831 = vpop.f32.mrb[0].mxu0
        %v832 = vadd.f32 %v543, %v831
        %v833 = vpop.f32.mrb[0].mxu0
        %834 = vmatprep.mubr.f32.mxu0 0.0
        %835 = vmatmul.mubr.f32.gmra.mrb[0].mxu0 %v694
        %v836 = vpop.f32.mrb[0].mxu0
        %v837 = vadd.f32 %v548, %v836
        %v838 = vpop.f32.mrb[0].mxu0
        %839 = vdwg.mxu0
        %v840 = vld [vmem:[%s3] sm:$0xff]
        %v841 = vld [vmem:[%s3 + $0x8] sm:$0xff]
        %v842 = vld [vmem:[%s3 + $0x10] sm:$0xff]
        %v843 = vld [vmem:[%s3 + $0x18] sm:$0xff]
        %v844 = vld [vmem:[%s3 + $0x20] sm:$0xff]
        %v845 = vld [vmem:[%s3 + $0x28] sm:$0xff]
        %v846 = vld [vmem:[%s3 + $0x30] sm:$0xff]
        %v847 = vld [vmem:[%s3 + $0x38] sm:$0xff]
        %v848 = vld [vmem:[%s3 + $0x40] sm:$0xff]
        %v849 = vld [vmem:[%s3 + $0x48] sm:$0xff]
        %v850 = vld [vmem:[%s3 + $0x50] sm:$0xff]
        %v851 = vld [vmem:[%s3 + $0x58] sm:$0xff]
        %v852 = vld [vmem:[%s3 + $0x60] sm:$0xff]
        %v853 = vld [vmem:[%s3 + $0x68] sm:$0xff]
        %v854 = vld [vmem:[%s3 + $0x70] sm:$0xff]
        %v855 = vld [vmem:[%s3 + $0x78] sm:$0xff]
        %857 = vset.pattern.permute.xlu0 0
        %858 = vperm.xlu0 %857, %v840
        %v859 = vpop.permute.xlu0 %858
        %862 = vset.pattern.permute.xlu0 0
        %863 = vperm.xlu0 %862, %v841
        %v864 = vpop.permute.xlu0 %863
        %867 = vset.pattern.permute.xlu0 0
        %868 = vperm.xlu0 %867, %v842
        %v869 = vpop.permute.xlu0 %868
        %872 = vset.pattern.permute.xlu0 0
        %873 = vperm.xlu0 %872, %v843
        %v874 = vpop.permute.xlu0 %873
        %877 = vset.pattern.permute.xlu0 0
        %878 = vperm.xlu0 %877, %v844
        %v879 = vpop.permute.xlu0 %878
        %882 = vset.pattern.permute.xlu0 0
        %883 = vperm.xlu0 %882, %v845
        %v884 = vpop.permute.xlu0 %883
        %887 = vset.pattern.permute.xlu0 0
        %888 = vperm.xlu0 %887, %v846
        %v889 = vpop.permute.xlu0 %888
        %892 = vset.pattern.permute.xlu0 0
        %893 = vperm.xlu0 %892, %v847
        %v894 = vpop.permute.xlu0 %893
        %897 = vset.pattern.permute.xlu0 0
        %898 = vperm.xlu0 %897, %v848
        %v899 = vpop.permute.xlu0 %898
        %902 = vset.pattern.permute.xlu0 0
        %903 = vperm.xlu0 %902, %v849
        %v904 = vpop.permute.xlu0 %903
        %907 = vset.pattern.permute.xlu0 0
        %908 = vperm.xlu0 %907, %v850
        %v909 = vpop.permute.xlu0 %908
        %912 = vset.pattern.permute.xlu0 0
        %913 = vperm.xlu0 %912, %v851
        %v914 = vpop.permute.xlu0 %913
        %917 = vset.pattern.permute.xlu0 0
        %918 = vperm.xlu0 %917, %v852
        %v919 = vpop.permute.xlu0 %918
        %922 = vset.pattern.permute.xlu0 0
        %923 = vperm.xlu0 %922, %v853
        %v924 = vpop.permute.xlu0 %923
        %927 = vset.pattern.permute.xlu0 0
        %928 = vperm.xlu0 %927, %v854
        %v929 = vpop.permute.xlu0 %928
        %932 = vset.pattern.permute.xlu0 0
        %933 = vperm.xlu0 %932, %v855
        %v934 = vpop.permute.xlu0 %933
        %v936 = vadd.f32 %v762, %v859
        %v937 = vadd.f32 %v767, %v864
        %v938 = vadd.f32 %v772, %v869
        %v939 = vadd.f32 %v777, %v874
        %v940 = vadd.f32 %v782, %v879
        %v941 = vadd.f32 %v787, %v884
        %v942 = vadd.f32 %v792, %v889
        %v943 = vadd.f32 %v797, %v894
        %v944 = vadd.f32 %v802, %v899
        %v945 = vadd.f32 %v807, %v904
        %v946 = vadd.f32 %v812, %v909
        %v947 = vadd.f32 %v817, %v914
        %v948 = vadd.f32 %v822, %v919
        %v949 = vadd.f32 %v827, %v924
        %v950 = vadd.f32 %v832, %v929
        %v951 = vadd.f32 %v837, %v934
        %952 = vst [vmem:[%s269] sm:$0xff] %v936
        %953 = vst [vmem:[%s269 + $0x8] sm:$0xff] %v937
        %954 = vst [vmem:[%s269 + $0x10] sm:$0xff] %v938
        %955 = vst [vmem:[%s269 + $0x18] sm:$0xff] %v939
        %956 = vst [vmem:[%s269 + $0x20] sm:$0xff] %v940
        %957 = vst [vmem:[%s269 + $0x28] sm:$0xff] %v941
        %958 = vst [vmem:[%s269 + $0x30] sm:$0xff] %v942
        %959 = vst [vmem:[%s269 + $0x38] sm:$0xff] %v943
        %960 = vst [vmem:[%s269 + $0x40] sm:$0xff] %v944
        %961 = vst [vmem:[%s269 + $0x48] sm:$0xff] %v945
        %962 = vst [vmem:[%s269 + $0x50] sm:$0xff] %v946
        %963 = vst [vmem:[%s269 + $0x58] sm:$0xff] %v947
        %964 = vst [vmem:[%s269 + $0x60] sm:$0xff] %v948
        %965 = vst [vmem:[%s269 + $0x68] sm:$0xff] %v949
        %966 = vst [vmem:[%s269 + $0x70] sm:$0xff] %v950
        %967 = vst [vmem:[%s269 + $0x78] sm:$0xff] %v951
        %s968 = sand.u32 %s155, 1
        %s969 = scalar_lea.sflag [#allocation4], %s968
        %s970 = sand.u32 %s155, 1
        %s971 = smul.addr %s970, 128
        %s972 = scalar_lea.vmem [#allocation7], %s971
        // Predicated region
        $region49: #{tpu_custom_call.1} parent=39 // pred_check
          %p973 = pneg %p165
        $region50: #{tpu_custom_call.1} parent=39 // pred_check_branch
          %975 = sbr.rel (%p973) target = $region52
        $region51: #{tpu_custom_call.1} parent=39 // pred_region
          %s977 = ssub.s32 2048, 2048
          %978 = vsyncadd %s969, %s977
          %s979 = smul.addr %s25, 16
          %s980 = sadd.s32 %s26, %s979
          %s981 = smul.addr %s980, 128
          %s982 = scalar_lea.hbm %s5, %s981
          %s983 = sshll.u32 %s972, 4
          %s984 = int_to_ptr.vmem [resolvable:$true] %s983
          %989 = dma.vmem_to_hbm [thread:$0]  %s984, 2048, %s982, %s969, 128, 128, 8
        $region52: #{tpu_custom_call.1} parent=39 // pred_fallthru
          _
      $region40: #{tpu_custom_call.1} parent=5 // pred_fallthru
        _
      %p990 = scmp.le.s32.totalorder 2, %s16
      // Predicated region
      $region53: #{tpu_custom_call.1} parent=5 // pred_check
        %p991 = pneg %p990
      $region54: #{tpu_custom_call.1} parent=5 // pred_check_branch
        %993 = sbr.rel (%p991) target = $region56
      $region55: #{tpu_custom_call.1} parent=5 // pred_region
        %s994 = ssub.s32 %s16, 2
        // Predicated region
        $region57: #{tpu_custom_call.1} parent=55 // pred_check
          %p995 = pneg %p171
        $region58: #{tpu_custom_call.1} parent=55 // pred_check_branch
          %997 = sbr.rel (%p995) target = $region60
        $region59: #{tpu_custom_call.1} parent=55 // pred_region
          %s998 = sand.u32 %s156, 1
          %s999 = scalar_lea.sflag [#allocation4], %s998
          %s1000 = sand.u32 %s156, 1
          %s1001 = smul.addr %s1000, 128
          %s1002 = scalar_lea.vmem [#allocation7], %s1001
          %1003 = dma.done %s999, 2048
        $region60: #{tpu_custom_call.1} parent=55 // pred_fallthru
          _
      $region56: #{tpu_custom_call.1} parent=5 // pred_fallthru
        _
    $region6: #{tpu_custom_call.1} parent=1 // loop_footer
      %s20 = sadd.s32 1, %s16
    $region7: #{tpu_custom_call.1} parent=1 // loop_footer_branch
      %15 = sbr.rel target = $region3
    $region8: #{tpu_custom_call.1} parent=1 // loop_exit
      _
    %1004 = vsyncpa [#allocation3], 1
    %s1005 = scalar_lea.sflag [#allocation3], 1
    %1006 = vsyncpa %s1005, 1
    %1007 = vsyncpa [#allocation6], 1
    %1008 = vsyncpa [#allocation4], 1
    %s1009 = scalar_lea.sflag [#allocation4], 1
    %1010 = vsyncpa %s1009, 1

</llo_original>
